<compile_context>
chip_gen: v5e
topology: v5e:2x2
jax: 0.10.0
libtpu: 0.0.40
codegen_flags: <defaults>
</compile_context>

<pallas_src>
import functools

import jax
import jax.numpy as jnp
from jax import lax
from jax.experimental import pallas as pl
from jax.experimental.pallas import tpu as pltpu

_SQRT_2_OVER_PI = 0.7978845608028654
_GELU_C = 0.044715
_A = _SQRT_2_OVER_PI
_AC = _SQRT_2_OVER_PI * _GELU_C


def _gelu_tanh_2x(x):
    """Returns 2 * GELU_tanh(x); the 0.5 prefactor is folded into W2^T outside.

    TODO(synk): PyTorch nn.GELU() defaults to the exact erf form; Mosaic has no
    erf lowering, so the tanh approximation is used (max abs err ~3e-4).
    """
    # x*(A + AC*x^2) == sqrt(2/pi)*(x + 0.044715*x^3), saves one VPU mul.
    t = jnp.tanh(x * (_A + _AC * (x * x)))
    return x + x * t


def _md_layer_kernel(x_ref, gamma_ref, beta_ref, w1t_ref, b1_ref, w2t_ref,
                     b2_ref, o_ref, *, eps, compute_dtype):
    f32 = jnp.float32
    x = x_ref[...].astype(f32)                       # (bb, S, D)
    gamma = gamma_ref[...].astype(f32)               # (1, D)
    beta = beta_ref[...].astype(f32)                 # (1, D)

    # LayerNorm over the feature axis D, block-wide (biased variance, like torch).
    mean = jnp.mean(x, axis=-1, keepdims=True)
    xc = x - mean
    var = jnp.mean(xc * xc, axis=-1, keepdims=True)
    xn = xc * lax.rsqrt(var + eps) * gamma + beta    # (bb, S, D) f32

    bb = x_ref.shape[0]
    H, S = w1t_ref.shape

    # Token-mixing MLP, transpose-free and block-wide.  The (tiny) weights are
    # broadcast across the batch block so both matmuls are canonical batched
    # (b,m,k)@(b,k,n) forms; output lane dim stays D (lane-dense stores).
    w1t_b = jnp.broadcast_to(w1t_ref[...][None], (bb, H, S))   # (bb, H, S) bf16
    w2t_b = jnp.broadcast_to(w2t_ref[...][None], (bb, S, H))   # (bb, S, H) bf16
    b1 = b1_ref[...].astype(f32)                     # (H, 1) -> broadcasts (bb, H, D)
    b2 = b2_ref[...].astype(f32)                     # (S, 1) -> broadcasts (bb, S, D)

    h = jnp.einsum("bhs,bsd->bhd", w1t_b, xn.astype(compute_dtype),
                   preferred_element_type=f32)       # (bb, H, D) f32
    h = _gelu_tanh_2x(h + b1)                        # 2*GELU; 0.5 folded into w2t
    # Dropout(0.1): identity in eval/inference mode.
    y = jnp.einsum("bsh,bhd->bsd", w2t_b, h.astype(compute_dtype),
                   preferred_element_type=f32)       # (bb, S, D) f32

    # 'b d s -> b s d' is free (y is already (bb, S, D)); residual + bias.
    o_ref[...] = (x + y + b2).astype(o_ref.dtype)


def _vmem_capacity_bytes():
    """Physical VMEM per TensorCore (v5e/v6e: 128 MiB, v7x: 64 MiB)."""
    try:
        cap = int(getattr(pltpu.get_tpu_info(), "vmem_capacity_bytes", 0))
        if cap > 0:
            return cap
    except Exception:
        pass
    return 64 * 2**20          # conservative default (v7x per-TensorCore)


_SINGLE_BUFFER_OK = None


def _single_buffer_supported():
    """One-time capability probe: can this jax/Mosaic build compile a pallas_call
    whose constant-index BlockSpec uses pipeline_mode=pl.Buffered(1)?  Replaces
    the old try/except around the real call (which does not work under jit and
    could mask unrelated errors)."""
    global _SINGLE_BUFFER_OK
    if _SINGLE_BUFFER_OK is not None:
        return _SINGLE_BUFFER_OK

    def probe_kernel(w_ref, x_ref, o_ref):
        o_ref[...] = x_ref[...] + w_ref[...]

    try:
        w_spec = pl.BlockSpec((8, 128), lambda i: (0, 0),
                              pipeline_mode=pl.Buffered(1))
        fn = pl.pallas_call(
            probe_kernel,
            out_shape=jax.ShapeDtypeStruct((16, 128), jnp.float32),
            grid_spec=pltpu.PrefetchScalarGridSpec(
                num_scalar_prefetch=0, grid=(2,),
                in_specs=[w_spec, pl.BlockSpec((8, 128), lambda i: (i, 0))],
                out_specs=pl.BlockSpec((8, 128), lambda i: (i, 0))),
        )
        w = jnp.zeros((8, 128), jnp.float32)
        xx = jnp.zeros((16, 128), jnp.float32)
        jax.jit(fn).lower(w, xx).compile()
        _SINGLE_BUFFER_OK = True
    except Exception:
        _SINGLE_BUFFER_OK = False
    return _SINGLE_BUFFER_OK


def _build_pallas_call(B, S, D, H, block_b, x_dtype, eps, compute_dtype,
                       single_buffer_weights):
    def const_spec(shape):
        kwargs = {}
        if single_buffer_weights:
            # Constant-index blocks never change across the grid -> 1 buffer.
            kwargs["pipeline_mode"] = pl.Buffered(1)
        return pl.BlockSpec(shape, lambda i: (0,) * len(shape), **kwargs)

    kernel = functools.partial(_md_layer_kernel, eps=eps,
                               compute_dtype=compute_dtype)

    itemsize_x = jnp.dtype(x_dtype).itemsize
    itemsize_w = jnp.dtype(compute_dtype).itemsize
    io_block = block_b * S * D * itemsize_x
    const_bytes = 2 * H * S * itemsize_w + (H + S + 2 * D) * 4
    interm = block_b * (4 * S * D + 3 * H * D) * 4       # block-wide f32 temporaries
    wbuf = 1 if single_buffer_weights else 2
    est = 4 * io_block + wbuf * const_bytes + interm

    cap = _vmem_capacity_bytes()
    vmem_limit = int(min(int(0.85 * cap), max(32 * 2**20, 2 * est)))

    cost = pl.CostEstimate(
        flops=4 * B * S * H * D + 12 * B * S * D,
        transcendentals=B * H * D + B * S,
        bytes_accessed=2 * B * S * D * itemsize_x + const_bytes)

    return pl.pallas_call(
        kernel,
        out_shape=jax.ShapeDtypeStruct((B, S, D), x_dtype),
        grid_spec=pltpu.PrefetchScalarGridSpec(
            num_scalar_prefetch=0,
            grid=(B // block_b,),
            in_specs=[
                pl.BlockSpec((block_b, S, D), lambda i: (i, 0, 0)),  # x
                const_spec((1, D)),                                  # gamma
                const_spec((1, D)),                                  # beta
                const_spec((H, S)),                                  # W1^T
                const_spec((H, 1)),                                  # b1
                const_spec((S, H)),                                  # 0.5 * W2^T
                const_spec((S, 1)),                                  # b2
            ],
            out_specs=pl.BlockSpec((block_b, S, D), lambda i: (i, 0, 0)),
        ),
        compiler_params=pltpu.CompilerParams(
            dimension_semantics=("parallel",),        # batch axis -> 2 TCs on v7x
            vmem_limit_bytes=vmem_limit),
        cost_estimate=cost,
    )


def _pick_block_b(B, S, D, H, x_itemsize, budget_bytes=16 * 2**20):
    """Largest divisor of B whose per-step working set (double-buffered x/out
    blocks + block-wide f32 temporaries) fits `budget_bytes`, while keeping
    >= 4 grid steps when B allows (>= 2 steps per TensorCore on v7x so the
    x-block DMA overlaps compute)."""
    per_row = 4 * S * D * x_itemsize + (4 * S * D + 3 * H * D) * 4
    target_steps = 4 if B >= 4 else max(1, B)
    max_bb = max(1, B // target_steps)
    best = 1
    for cand in range(1, max_bb + 1):
        if B % cand == 0 and cand * per_row <= budget_bytes:
            best = cand
    return best


def prepare_md_layer_params(gamma, beta, w1, b1, w2, b2, *,
                            compute_dtype=jnp.bfloat16):
    """One-time weight preparation — do this at model load and cache the result.

    Pre-transposes the MLP weights (removes both in-kernel (S,D)<->(D,S)
    transposes), folds the 0.5 GELU prefactor into W2^T, casts the MXU weight
    operands to `compute_dtype`, and reshapes LN params / biases for the kernel.
    """
    w1 = jnp.asarray(w1)
    S, H = w1.shape
    D = jnp.asarray(gamma).shape[-1]
    f32 = jnp.float32
    return {
        "gamma": jnp.asarray(gamma, f32).reshape(1, D),
        "beta": jnp.asarray(beta, f32).reshape(1, D),
        "w1t": w1.T.astype(compute_dtype),                            # (H, S)
        "b1": jnp.asarray(b1, f32).reshape(H, 1),
        "w2t": (0.5 * jnp.asarray(w2, f32)).T.astype(compute_dtype),  # (S, H)
        "b2": jnp.asarray(b2, f32).reshape(S, 1),
    }


def md_layer_apply(x, params, *, eps=1e-5, block_b=None,
                   single_buffer_weights=None):
    """Fused MDLayer forward using pre-prepared params.  x: (B, S, D).
    x / out may be bf16 to halve HBM traffic; LN/GELU/residual math stays f32."""
    B, S, D = x.shape
    H = params["w1t"].shape[0]
    compute_dtype = params["w1t"].dtype
    if block_b is None:
        block_b = _pick_block_b(B, S, D, H, jnp.dtype(x.dtype).itemsize)
    assert B % block_b == 0, (B, block_b)
    if single_buffer_weights is None:
        single_buffer_weights = _single_buffer_supported()
    fn = _build_pallas_call(B, S, D, H, block_b, x.dtype, eps, compute_dtype,
                            bool(single_buffer_weights))
    return fn(x, params["gamma"], params["beta"], params["w1t"], params["b1"],
              params["w2t"], params["b2"])


def md_layer(x, gamma, beta, w1, b1, w2, b2, *, eps=1e-5,
             compute_dtype=jnp.bfloat16, block_b=None):
    """Convenience wrapper.  For serving, call prepare_md_layer_params once and
    reuse md_layer_apply — this avoids a per-call weight transpose/cast."""
    params = prepare_md_layer_params(gamma, beta, w1, b1, w2, b2,
                                     compute_dtype=compute_dtype)
    return md_layer_apply(x, params, eps=eps, block_b=block_b)


def md_layer_ref(x, gamma, beta, w1, b1, w2, b2, *, eps=1e-5,
                 compute_dtype=jnp.float32):
    """Pure-JAX reference.  compute_dtype=bf16 mirrors the kernel's MXU rounding."""
    f32 = jnp.float32
    cast = lambda a: a.astype(compute_dtype).astype(f32)
    mean = jnp.mean(x, axis=-1, keepdims=True)
    xc = x - mean
    var = jnp.mean(xc * xc, axis=-1, keepdims=True)
    xn = xc * jax.lax.rsqrt(var + eps) * gamma + beta
    xt = jnp.transpose(xn, (0, 2, 1))                        # b s d -> b d s
    h = jnp.einsum("bds,sh->bdh", cast(xt), cast(w1),
                   precision=jax.lax.Precision.HIGHEST) + b1
    g = 0.5 * h * (1.0 + jnp.tanh(_SQRT_2_OVER_PI * (h + _GELU_C * h * h * h)))
    y = jnp.einsum("bdh,hs->bds", cast(g), cast(w2),
                   precision=jax.lax.Precision.HIGHEST) + b2
    return x + jnp.transpose(y, (0, 2, 1))                   # b d s -> b s d


if __name__ == "__main__":
    # batch=8, tokens(op_dim)=S=16, features(dim)=D=128 (lane-dense), E=4 -> H=64.
    B, S, D, E = 8, 16, 128, 4
    H = S * E

    key = jax.random.PRNGKey(0)
    ks = jax.random.split(key, 7)
    x     = jax.random.normal(ks[0], (B, S, D), jnp.float32)
    gamma = 1.0 + 0.1 * jax.random.normal(ks[1], (D,), jnp.float32)
    beta  = 0.1 * jax.random.normal(ks[2], (D,), jnp.float32)
    w1    = 0.2 * jax.random.normal(ks[3], (S, H), jnp.float32)
    b1    = 0.1 * jax.random.normal(ks[4], (H,), jnp.float32)
    w2    = 0.2 * jax.random.normal(ks[5], (H, S), jnp.float32)
    b2    = 0.1 * jax.random.normal(ks[6], (S,), jnp.float32)

    # Weight prep happens once ("model load"); the kernel call reuses it.
    params = prepare_md_layer_params(gamma, beta, w1, b1, w2, b2)
    out = jax.block_until_ready(md_layer_apply(x, params))
    assert out.shape == (B, S, D) and out.dtype == jnp.float32

    # Tight check vs a reference that mirrors the kernel's bf16 MXU operands.
    ref_bf16 = md_layer_ref(x, gamma, beta, w1, b1, w2, b2,
                            compute_dtype=jnp.bfloat16)
    err_bf16 = float(jnp.max(jnp.abs(out - ref_bf16)))
    assert err_bf16 < 5e-3, f"kernel vs bf16-matmul reference: {err_bf16}"

    # Loose sanity check vs the full-f32 reference (bf16 operand rounding only).
    ref_f32 = md_layer_ref(x, gamma, beta, w1, b1, w2, b2)
    err_f32 = float(jnp.max(jnp.abs(out - ref_f32)))
    assert err_f32 < 1e-1, f"kernel vs f32 reference: {err_f32}"

    print("KERNEL_OK")
</pallas_src>

<mosaic_0001>
module attributes {stable_mosaic.version = 11 : i64} {
  func.func @_md_layer_kernel(%arg0: i32, %arg1: memref<2x16x128xf32, #tpu.memory_space<vmem>>, %arg2: memref<1x128xf32, #tpu.memory_space<vmem>>, %arg3: memref<1x128xf32, #tpu.memory_space<vmem>>, %arg4: memref<64x16xbf16, #tpu.memory_space<vmem>>, %arg5: memref<64x1xf32, #tpu.memory_space<vmem>>, %arg6: memref<16x64xbf16, #tpu.memory_space<vmem>>, %arg7: memref<16x1xf32, #tpu.memory_space<vmem>>, %arg8: memref<2x16x128xf32, #tpu.memory_space<vmem>>) attributes {dimension_semantics = [#tpu.dimension_semantics<parallel>], iteration_bounds = array<i64: 4>, scalar_prefetch = 0 : i64, scratch_operands = 0 : i64, tpu.core_type = #tpu.core_type<tc>, window_params = [{transform_indices = @transform_0, window_bounds = array<i64: 2, 16, 128>}, {pipeline_mode = #tpu.pipeline_mode<synchronous>, transform_indices = @transform_1, window_bounds = array<i64: 1, 128>}, {pipeline_mode = #tpu.pipeline_mode<synchronous>, transform_indices = @transform_2, window_bounds = array<i64: 1, 128>}, {pipeline_mode = #tpu.pipeline_mode<synchronous>, transform_indices = @transform_3, window_bounds = array<i64: 64, 16>}, {pipeline_mode = #tpu.pipeline_mode<synchronous>, transform_indices = @transform_4, window_bounds = array<i64: 64, 1>}, {pipeline_mode = #tpu.pipeline_mode<synchronous>, transform_indices = @transform_5, window_bounds = array<i64: 16, 64>}, {pipeline_mode = #tpu.pipeline_mode<synchronous>, transform_indices = @transform_6, window_bounds = array<i64: 16, 1>}, {transform_indices = @transform_7, window_bounds = array<i64: 2, 16, 128>}]} {
    %c0 = arith.constant 0 : index
    %c0_0 = arith.constant 0 : index
    %c0_1 = arith.constant 0 : index
    %0 = vector.load %arg1[%c0, %c0_0, %c0_1] : memref<2x16x128xf32, #tpu.memory_space<vmem>>, vector<2x16x128xf32>
    %c0_2 = arith.constant 0 : index
    %c0_3 = arith.constant 0 : index
    %1 = vector.load %arg2[%c0_2, %c0_3] : memref<1x128xf32, #tpu.memory_space<vmem>>, vector<1x128xf32>
    %c0_4 = arith.constant 0 : index
    %c0_5 = arith.constant 0 : index
    %2 = vector.load %arg3[%c0_4, %c0_5] : memref<1x128xf32, #tpu.memory_space<vmem>>, vector<1x128xf32>
    %cst = arith.constant dense<0.000000e+00> : vector<2x16xf32>
    %3 = vector.multi_reduction <add>, %0, %cst [2] : vector<2x16x128xf32> to vector<2x16xf32>
    %4 = vector.shape_cast %3 : vector<2x16xf32> to vector<2x16x1xf32>
    %cst_6 = arith.constant 1.280000e+02 : f32
    %5 = vector.broadcast %cst_6 : f32 to vector<2x16x1xf32>
    %6 = arith.divf %4, %5 : vector<2x16x1xf32>
    %7 = vector.broadcast %6 : vector<2x16x1xf32> to vector<2x16x128xf32>
    %8 = arith.subf %0, %7 : vector<2x16x128xf32>
    %9 = arith.mulf %8, %8 : vector<2x16x128xf32>
    %cst_7 = arith.constant dense<0.000000e+00> : vector<2x16xf32>
    %10 = vector.multi_reduction <add>, %9, %cst_7 [2] : vector<2x16x128xf32> to vector<2x16xf32>
    %11 = vector.shape_cast %10 : vector<2x16xf32> to vector<2x16x1xf32>
    %cst_8 = arith.constant 1.280000e+02 : f32
    %12 = vector.broadcast %cst_8 : f32 to vector<2x16x1xf32>
    %13 = arith.divf %11, %12 : vector<2x16x1xf32>
    %cst_9 = arith.constant 9.99999974E-6 : f32
    %14 = vector.broadcast %cst_9 : f32 to vector<2x16x1xf32>
    %15 = arith.addf %13, %14 : vector<2x16x1xf32>
    %16 = math.rsqrt %15 : vector<2x16x1xf32>
    %17 = vector.broadcast %16 : vector<2x16x1xf32> to vector<2x16x128xf32>
    %18 = arith.mulf %8, %17 : vector<2x16x128xf32>
    %19 = vector.shape_cast %1 : vector<1x128xf32> to vector<1x1x128xf32>
    %20 = vector.broadcast %19 : vector<1x1x128xf32> to vector<2x16x128xf32>
    %21 = arith.mulf %18, %20 : vector<2x16x128xf32>
    %22 = vector.shape_cast %2 : vector<1x128xf32> to vector<1x1x128xf32>
    %23 = vector.broadcast %22 : vector<1x1x128xf32> to vector<2x16x128xf32>
    %24 = arith.addf %21, %23 : vector<2x16x128xf32>
    %c0_10 = arith.constant 0 : index
    %c0_11 = arith.constant 0 : index
    %25 = vector.load %arg4[%c0_10, %c0_11] : memref<64x16xbf16, #tpu.memory_space<vmem>>, vector<64x16xbf16>
    %26 = vector.shape_cast %25 : vector<64x16xbf16> to vector<1x64x16xbf16>
    %27 = vector.shape_cast %26 : vector<1x64x16xbf16> to vector<1x64x16xbf16>
    %28 = vector.broadcast %27 : vector<1x64x16xbf16> to vector<2x64x16xbf16>
    %c0_12 = arith.constant 0 : index
    %c0_13 = arith.constant 0 : index
    %29 = vector.load %arg6[%c0_12, %c0_13] : memref<16x64xbf16, #tpu.memory_space<vmem>>, vector<16x64xbf16>
    %30 = vector.shape_cast %29 : vector<16x64xbf16> to vector<1x16x64xbf16>
    %31 = vector.shape_cast %30 : vector<1x16x64xbf16> to vector<1x16x64xbf16>
    %32 = vector.broadcast %31 : vector<1x16x64xbf16> to vector<2x16x64xbf16>
    %c0_14 = arith.constant 0 : index
    %c0_15 = arith.constant 0 : index
    %33 = vector.load %arg5[%c0_14, %c0_15] : memref<64x1xf32, #tpu.memory_space<vmem>>, vector<64x1xf32>
    %c0_16 = arith.constant 0 : index
    %c0_17 = arith.constant 0 : index
    %34 = vector.load %arg7[%c0_16, %c0_17] : memref<16x1xf32, #tpu.memory_space<vmem>>, vector<16x1xf32>
    %35 = arith.truncf %24 : vector<2x16x128xf32> to vector<2x16x128xbf16>
    "tpu.trace_start"() <{level = 10 : i32, message = "bhs,bsd->bhd"}> : () -> ()
    %cst_18 = arith.constant dense<0.000000e+00> : vector<2x64x128xf32>
    %36 = tpu.matmul %28, %35, %cst_18 {dimension_numbers = #tpu.dot_dimension_numbers<[2], [1], [1], [2], [0, 0, 0, 1, 1, 2], [0], [0]>} : vector<2x64x16xbf16>, vector<2x16x128xbf16>, vector<2x64x128xf32> -> vector<2x64x128xf32>
    "tpu.trace_stop"() : () -> ()
    %37 = vector.shape_cast %33 : vector<64x1xf32> to vector<1x64x1xf32>
    %38 = vector.broadcast %37 : vector<1x64x1xf32> to vector<2x64x128xf32>
    %39 = arith.addf %36, %38 : vector<2x64x128xf32>
    %40 = arith.mulf %39, %39 : vector<2x64x128xf32>
    %cst_19 = arith.constant 0.0356774069 : f32
    %41 = vector.broadcast %cst_19 : f32 to vector<2x64x128xf32>
    %42 = arith.mulf %41, %40 : vector<2x64x128xf32>
    %cst_20 = arith.constant 0.797884583 : f32
    %43 = vector.broadcast %cst_20 : f32 to vector<2x64x128xf32>
    %44 = arith.addf %43, %42 : vector<2x64x128xf32>
    %45 = arith.mulf %39, %44 : vector<2x64x128xf32>
    %46 = math.tanh %45 : vector<2x64x128xf32>
    %47 = arith.mulf %39, %46 : vector<2x64x128xf32>
    %48 = arith.addf %39, %47 : vector<2x64x128xf32>
    %49 = arith.truncf %48 : vector<2x64x128xf32> to vector<2x64x128xbf16>
    "tpu.trace_start"() <{level = 10 : i32, message = "bsh,bhd->bsd"}> : () -> ()
    %cst_21 = arith.constant dense<0.000000e+00> : vector<2x16x128xf32>
    %50 = tpu.matmul %32, %49, %cst_21 {dimension_numbers = #tpu.dot_dimension_numbers<[2], [1], [1], [2], [0, 0, 0, 1, 1, 2], [0], [0]>} : vector<2x16x64xbf16>, vector<2x64x128xbf16>, vector<2x16x128xf32> -> vector<2x16x128xf32>
    "tpu.trace_stop"() : () -> ()
    %51 = arith.addf %0, %50 : vector<2x16x128xf32>
    %52 = vector.shape_cast %34 : vector<16x1xf32> to vector<1x16x1xf32>
    %53 = vector.broadcast %52 : vector<1x16x1xf32> to vector<2x16x128xf32>
    %54 = arith.addf %51, %53 : vector<2x16x128xf32>
    %c0_22 = arith.constant 0 : index
    %c0_23 = arith.constant 0 : index
    %c0_24 = arith.constant 0 : index
    %55 = vector.load %arg8[%c0_22, %c0_23, %c0_24] : memref<2x16x128xf32, #tpu.memory_space<vmem>>, vector<2x16x128xf32>
    tpu.vector_store %arg8[%c0_22, %c0_23, %c0_24], %54 {strides = array<i32>} : memref<2x16x128xf32, #tpu.memory_space<vmem>>, vector<2x16x128xf32>,
    return
  }
  func.func @transform_0(%arg0: i32) -> (i32, i32, i32) {
    %c0_i32 = arith.constant 0 : i32
    %c0_i32_0 = arith.constant 0 : i32
    %c0_i32_1 = arith.constant 0 : i32
    return %arg0, %c0_i32, %c0_i32_0 : i32, i32, i32
  }
  func.func @transform_1(%arg0: i32) -> (i32, i32) {
    %c0_i32 = arith.constant 0 : i32
    %c0_i32_0 = arith.constant 0 : i32
    %c0_i32_1 = arith.constant 0 : i32
    return %c0_i32, %c0_i32_0 : i32, i32
  }
  func.func @transform_2(%arg0: i32) -> (i32, i32) {
    %c0_i32 = arith.constant 0 : i32
    %c0_i32_0 = arith.constant 0 : i32
    %c0_i32_1 = arith.constant 0 : i32
    return %c0_i32, %c0_i32_0 : i32, i32
  }
  func.func @transform_3(%arg0: i32) -> (i32, i32) {
    %c0_i32 = arith.constant 0 : i32
    %c0_i32_0 = arith.constant 0 : i32
    %c0_i32_1 = arith.constant 0 : i32
    return %c0_i32, %c0_i32_0 : i32, i32
  }
  func.func @transform_4(%arg0: i32) -> (i32, i32) {
    %c0_i32 = arith.constant 0 : i32
    %c0_i32_0 = arith.constant 0 : i32
    %c0_i32_1 = arith.constant 0 : i32
    return %c0_i32, %c0_i32_0 : i32, i32
  }
  func.func @transform_5(%arg0: i32) -> (i32, i32) {
    %c0_i32 = arith.constant 0 : i32
    %c0_i32_0 = arith.constant 0 : i32
    %c0_i32_1 = arith.constant 0 : i32
    return %c0_i32, %c0_i32_0 : i32, i32
  }
  func.func @transform_6(%arg0: i32) -> (i32, i32) {
    %c0_i32 = arith.constant 0 : i32
    %c0_i32_0 = arith.constant 0 : i32
    %c0_i32_1 = arith.constant 0 : i32
    return %c0_i32, %c0_i32_0 : i32, i32
  }
  func.func @transform_7(%arg0: i32) -> (i32, i32, i32) {
    %c0_i32 = arith.constant 0 : i32
    %c0_i32_0 = arith.constant 0 : i32
    %c0_i32_1 = arith.constant 0 : i32
    return %arg0, %c0_i32, %c0_i32_0 : i32, i32, i32
  }
}

</mosaic_0001>

<llo_original>
// kernel: tpu_custom_call.1
$region0: #{tpu_custom_call.1}
  #allocation0 [shape = 'u32[]', space=smem, size = 0x4, offset = 0x4, fixed_abs, tag = 'smem constant byte address 0x4 - core index']
  #allocation1 [shape = 'u32[72,128]{1,0:T(1,128)}', space=vmem, size = 0x9000, scoped, tag = 'internal scratch']
  %s0 = inlined_call_operand.hbm [shape: f32[8,16,128], index: 0, kind: input, shape index: {}]
  %s1 = inlined_call_operand.vmem [shape: f32[1,128], index: 1, kind: input, shape index: {}]
  %s2 = inlined_call_operand.vmem [shape: f32[1,128], index: 2, kind: input, shape index: {}]
  %s3 = inlined_call_operand.vmem [shape: bf16[64,16], index: 3, kind: input, shape index: {}]
  %s4 = inlined_call_operand.vmem [shape: f32[64,1], index: 4, kind: input, shape index: {}]
  %s5 = inlined_call_operand.vmem [shape: bf16[16,64], index: 5, kind: input, shape index: {}]
  %s6 = inlined_call_operand.vmem [shape: f32[16,1], index: 6, kind: input, shape index: {}]
  %s7 = inlined_call_operand.hbm [shape: f32[8,16,128], index: 7, kind: output, shape index: {}]
  %s8 = sld [smem:[#allocation0]]
  $region65: #{tpu_custom_call.1} parent=0
    _
  %s10 = ssub.s32 1, %s8
  %s11 = scalar_select 0, %s10, %s8
  $region1: #{tpu_custom_call.1} parent=0
    #allocation2 [shape = 'u8[32768]{0}', space=vmem, size = 0x8000, scoped, tag = 'input window, operand 0']
    #allocation3 [shape = 's32[2]{0}', space=sflag, size = 0x8, scoped, tag = 'scoped memory for tpu_custom_call.1']
    #allocation4 [shape = 's32[2]{0}', space=sflag, size = 0x8, scoped, tag = 'scoped memory for tpu_custom_call.1']
    #allocation5 [shape = 'u8[32768]{0}', space=vmem, size = 0x8000, scoped, tag = 'output window, operand 0']
    %12 = vsyncpa [#allocation3], 0
    %s13 = scalar_lea.sflag [#allocation3], 1
    %14 = vsyncpa %s13, 0
    %15 = vsyncpa [#allocation4], 0
    %s16 = scalar_lea.sflag [#allocation4], 1
    %17 = vsyncpa %s16, 0
    loop: start=0, step=1, limit=6
    $region2: #{tpu_custom_call.1} parent=1 // loop_pre_header
      _
    $region3: #{tpu_custom_call.1} parent=1 // loop_header
      %s19 = sphi 0, %s23
      %p20 = scmp.ge.s32.totalorder %s19, 6
      %s29 = sphi 0, %s31
      %s32 = sphi 0, %s29
      %s33 = sphi 0, %s32
      %s49 = sphi 0, %s33
      %s53 = sphi 0, %s53
      %s55 = sphi 0, %s53
      %s56 = sphi 0, %s55
      %s70 = sphi 0, %s56
      %s74 = sphi 0, %s74
      %s76 = sphi 0, %s74
      %s77 = sphi 0, %s76
      %s91 = sphi 0, %s77
      %s95 = sphi 0, %s95
      %s97 = sphi 0, %s95
      %s98 = sphi 0, %s97
      %s112 = sphi 0, %s98
      %s116 = sphi 0, %s116
      %s118 = sphi 0, %s116
      %s119 = sphi 0, %s118
      %s133 = sphi 0, %s119
      %s137 = sphi 0, %s137
      %s139 = sphi 0, %s137
      %s140 = sphi 0, %s139
      %s154 = sphi 0, %s140
      %s158 = sphi 0, %s158
      %s160 = sphi 0, %s158
      %s161 = sphi 0, %s160
      %s175 = sphi 0, %s161
      %s181 = sphi 0, %s183
      %s184 = sphi 0, %s181
      %s185 = sphi 0, %s184
      %s201 = sphi 0, %s185
    $region4: #{tpu_custom_call.1} parent=1 // loop_header_branch
      %22 = sbr.rel (%p20) target = $region8
    $region5: #{tpu_custom_call.1} parent=1 // loop_body
      %s24 = ssub.s32 %s19, 1
      %s25 = ssub.s32 %s19, 2
      %s26 = sadd.s32 %s19, 1
      %s27 = ssub.s32 %s19, %s26
      %p28 = scmp.eq.s32.totalorder %s27, 0
      %s30 = sadd.s32 %s29, 1
      %s31 = scalar_select %p28, %s29, %s30
      %p34 = pneg %p28
      %p35 = scmp.eq.s32.totalorder %s19, 3
      %p36 = por %p34, %p35
      %p37 = scmp.ne.s32.totalorder %s29, %s32
      %p38 = scmp.eq.s32.totalorder %s19, 0
      %p39 = por %p37, %p38
      %p40 = scmp.ne.s32.totalorder %s29, %s32
      %p41 = scmp.eq.s32.totalorder %s24, 3
      %p42 = por %p40, %p41
      %p43 = scmp.ne.s32.totalorder %s32, %s33
      %p44 = scmp.eq.s32.totalorder %s24, 0
      %p45 = por %p43, %p44
      %p46 = scmp.ne.s32.totalorder %s32, %s33
      %p47 = scmp.eq.s32.totalorder %s25, 3
      %p48 = por %p46, %p47
      %p50 = scmp.ne.s32.totalorder %s33, %s49
      %p51 = scmp.eq.s32.totalorder %s25, 0
      %p52 = por %p50, %p51
      %s54 = sadd.s32 %s53, 1
      %p57 = scmp.eq.s32.totalorder %s19, 3
      %p58 = scmp.ne.s32.totalorder %s53, %s55
      %p59 = scmp.eq.s32.totalorder %s19, 0
      %p60 = por %p58, %p59
      %p61 = scmp.ne.s32.totalorder %s53, %s55
      %p62 = scmp.eq.s32.totalorder %s24, 3
      %p63 = por %p61, %p62
      %p64 = scmp.ne.s32.totalorder %s55, %s56
      %p65 = scmp.eq.s32.totalorder %s24, 0
      %p66 = por %p64, %p65
      %p67 = scmp.ne.s32.totalorder %s55, %s56
      %p68 = scmp.eq.s32.totalorder %s25, 3
      %p69 = por %p67, %p68
      %p71 = scmp.ne.s32.totalorder %s56, %s70
      %p72 = scmp.eq.s32.totalorder %s25, 0
      %p73 = por %p71, %p72
      %s75 = sadd.s32 %s74, 1
      %p78 = scmp.eq.s32.totalorder %s19, 3
      %p79 = scmp.ne.s32.totalorder %s74, %s76
      %p80 = scmp.eq.s32.totalorder %s19, 0
      %p81 = por %p79, %p80
      %p82 = scmp.ne.s32.totalorder %s74, %s76
      %p83 = scmp.eq.s32.totalorder %s24, 3
      %p84 = por %p82, %p83
      %p85 = scmp.ne.s32.totalorder %s76, %s77
      %p86 = scmp.eq.s32.totalorder %s24, 0
      %p87 = por %p85, %p86
      %p88 = scmp.ne.s32.totalorder %s76, %s77
      %p89 = scmp.eq.s32.totalorder %s25, 3
      %p90 = por %p88, %p89
      %p92 = scmp.ne.s32.totalorder %s77, %s91
      %p93 = scmp.eq.s32.totalorder %s25, 0
      %p94 = por %p92, %p93
      %s96 = sadd.s32 %s95, 1
      %p99 = scmp.eq.s32.totalorder %s19, 3
      %p100 = scmp.ne.s32.totalorder %s95, %s97
      %p101 = scmp.eq.s32.totalorder %s19, 0
      %p102 = por %p100, %p101
      %p103 = scmp.ne.s32.totalorder %s95, %s97
      %p104 = scmp.eq.s32.totalorder %s24, 3
      %p105 = por %p103, %p104
      %p106 = scmp.ne.s32.totalorder %s97, %s98
      %p107 = scmp.eq.s32.totalorder %s24, 0
      %p108 = por %p106, %p107
      %p109 = scmp.ne.s32.totalorder %s97, %s98
      %p110 = scmp.eq.s32.totalorder %s25, 3
      %p111 = por %p109, %p110
      %p113 = scmp.ne.s32.totalorder %s98, %s112
      %p114 = scmp.eq.s32.totalorder %s25, 0
      %p115 = por %p113, %p114
      %s117 = sadd.s32 %s116, 1
      %p120 = scmp.eq.s32.totalorder %s19, 3
      %p121 = scmp.ne.s32.totalorder %s116, %s118
      %p122 = scmp.eq.s32.totalorder %s19, 0
      %p123 = por %p121, %p122
      %p124 = scmp.ne.s32.totalorder %s116, %s118
      %p125 = scmp.eq.s32.totalorder %s24, 3
      %p126 = por %p124, %p125
      %p127 = scmp.ne.s32.totalorder %s118, %s119
      %p128 = scmp.eq.s32.totalorder %s24, 0
      %p129 = por %p127, %p128
      %p130 = scmp.ne.s32.totalorder %s118, %s119
      %p131 = scmp.eq.s32.totalorder %s25, 3
      %p132 = por %p130, %p131
      %p134 = scmp.ne.s32.totalorder %s119, %s133
      %p135 = scmp.eq.s32.totalorder %s25, 0
      %p136 = por %p134, %p135
      %s138 = sadd.s32 %s137, 1
      %p141 = scmp.eq.s32.totalorder %s19, 3
      %p142 = scmp.ne.s32.totalorder %s137, %s139
      %p143 = scmp.eq.s32.totalorder %s19, 0
      %p144 = por %p142, %p143
      %p145 = scmp.ne.s32.totalorder %s137, %s139
      %p146 = scmp.eq.s32.totalorder %s24, 3
      %p147 = por %p145, %p146
      %p148 = scmp.ne.s32.totalorder %s139, %s140
      %p149 = scmp.eq.s32.totalorder %s24, 0
      %p150 = por %p148, %p149
      %p151 = scmp.ne.s32.totalorder %s139, %s140
      %p152 = scmp.eq.s32.totalorder %s25, 3
      %p153 = por %p151, %p152
      %p155 = scmp.ne.s32.totalorder %s140, %s154
      %p156 = scmp.eq.s32.totalorder %s25, 0
      %p157 = por %p155, %p156
      %s159 = sadd.s32 %s158, 1
      %p162 = scmp.eq.s32.totalorder %s19, 3
      %p163 = scmp.ne.s32.totalorder %s158, %s160
      %p164 = scmp.eq.s32.totalorder %s19, 0
      %p165 = por %p163, %p164
      %p166 = scmp.ne.s32.totalorder %s158, %s160
      %p167 = scmp.eq.s32.totalorder %s24, 3
      %p168 = por %p166, %p167
      %p169 = scmp.ne.s32.totalorder %s160, %s161
      %p170 = scmp.eq.s32.totalorder %s24, 0
      %p171 = por %p169, %p170
      %p172 = scmp.ne.s32.totalorder %s160, %s161
      %p173 = scmp.eq.s32.totalorder %s25, 3
      %p174 = por %p172, %p173
      %p176 = scmp.ne.s32.totalorder %s161, %s175
      %p177 = scmp.eq.s32.totalorder %s25, 0
      %p178 = por %p176, %p177
      %s179 = ssub.s32 %s19, %s26
      %p180 = scmp.eq.s32.totalorder %s179, 0
      %s182 = sadd.s32 %s181, 1
      %s183 = scalar_select %p180, %s181, %s182
      %p186 = pneg %p180
      %p187 = scmp.eq.s32.totalorder %s19, 3
      %p188 = por %p186, %p187
      %p189 = scmp.ne.s32.totalorder %s181, %s184
      %p190 = scmp.eq.s32.totalorder %s19, 0
      %p191 = por %p189, %p190
      %p192 = scmp.ne.s32.totalorder %s181, %s184
      %p193 = scmp.eq.s32.totalorder %s24, 3
      %p194 = por %p192, %p193
      %p195 = scmp.ne.s32.totalorder %s184, %s185
      %p196 = scmp.eq.s32.totalorder %s24, 0
      %p197 = por %p195, %p196
      %p198 = scmp.ne.s32.totalorder %s184, %s185
      %p199 = scmp.eq.s32.totalorder %s25, 3
      %p200 = por %p198, %p199
      %p202 = scmp.ne.s32.totalorder %s185, %s201
      %p203 = scmp.eq.s32.totalorder %s25, 0
      %p204 = por %p202, %p203
      %p205 = scmp.le.s32.totalorder 1, %s19
      %p206 = scmp.lt.s32.totalorder %s19, 5
      %p207 = pnand %p205, %p206
      %p208 = pneg %p207
      // Predicated region
      $region9: #{tpu_custom_call.1} parent=5 // pred_check
        _
      $region10: #{tpu_custom_call.1} parent=5 // pred_check_branch
        %210 = sbr.rel (%p207) target = $region12
      $region11: #{tpu_custom_call.1} parent=5 // pred_region
        %s211 = ssub.s32 %s19, 1
        // Predicated region
        $region13: #{tpu_custom_call.1} parent=11 // pred_check
          %p212 = pneg %p66
        $region14: #{tpu_custom_call.1} parent=11 // pred_check_branch
          %214 = sbr.rel (%p212) target = $region16
        $region15: #{tpu_custom_call.1} parent=11 // pred_region
          _
        $region16: #{tpu_custom_call.1} parent=11 // pred_fallthru
          _
        // Predicated region
        $region17: #{tpu_custom_call.1} parent=11 // pred_check
          %p215 = pneg %p87
        $region18: #{tpu_custom_call.1} parent=11 // pred_check_branch
          %217 = sbr.rel (%p215) target = $region20
        $region19: #{tpu_custom_call.1} parent=11 // pred_region
          _
        $region20: #{tpu_custom_call.1} parent=11 // pred_fallthru
          _
        // Predicated region
        $region21: #{tpu_custom_call.1} parent=11 // pred_check
          %p218 = pneg %p108
        $region22: #{tpu_custom_call.1} parent=11 // pred_check_branch
          %220 = sbr.rel (%p218) target = $region24
        $region23: #{tpu_custom_call.1} parent=11 // pred_region
          _
        $region24: #{tpu_custom_call.1} parent=11 // pred_fallthru
          _
        // Predicated region
        $region25: #{tpu_custom_call.1} parent=11 // pred_check
          %p221 = pneg %p129
        $region26: #{tpu_custom_call.1} parent=11 // pred_check_branch
          %223 = sbr.rel (%p221) target = $region28
        $region27: #{tpu_custom_call.1} parent=11 // pred_region
          _
        $region28: #{tpu_custom_call.1} parent=11 // pred_fallthru
          _
        // Predicated region
        $region29: #{tpu_custom_call.1} parent=11 // pred_check
          %p224 = pneg %p150
        $region30: #{tpu_custom_call.1} parent=11 // pred_check_branch
          %226 = sbr.rel (%p224) target = $region32
        $region31: #{tpu_custom_call.1} parent=11 // pred_region
          _
        $region32: #{tpu_custom_call.1} parent=11 // pred_fallthru
          _
        // Predicated region
        $region33: #{tpu_custom_call.1} parent=11 // pred_check
          %p227 = pneg %p171
        $region34: #{tpu_custom_call.1} parent=11 // pred_check_branch
          %229 = sbr.rel (%p227) target = $region36
        $region35: #{tpu_custom_call.1} parent=11 // pred_region
          _
        $region36: #{tpu_custom_call.1} parent=11 // pred_fallthru
          _
      $region12: #{tpu_custom_call.1} parent=5 // pred_fallthru
        _
      %p230 = scmp.lt.s32.totalorder %s19, 4
      // Predicated region
      $region37: #{tpu_custom_call.1} parent=5 // pred_check
        %p231 = pneg %p230
      $region38: #{tpu_custom_call.1} parent=5 // pred_check_branch
        %233 = sbr.rel (%p231) target = $region40
      $region39: #{tpu_custom_call.1} parent=5 // pred_region
        // Predicated region
        $region41: #{tpu_custom_call.1} parent=39 // pred_check
          %p234 = pneg %p39
        $region42: #{tpu_custom_call.1} parent=39 // pred_check_branch
          %236 = sbr.rel (%p234) target = $region44
        $region43: #{tpu_custom_call.1} parent=39 // pred_region
          %s237 = sand.u32 %s29, 1
          %s238 = scalar_lea.sflag [#allocation3], %s237
          %s239 = sand.u32 %s29, 1
          %s240 = smul.addr %s239, 32
          %s241 = scalar_lea.vmem [#allocation2], %s240
          %s242 = smul.u32 2, %s19
          %244 = vsyncadd %s238, 0
          %s245 = smul.addr %s242, 2
          %s246 = smul.addr %s245, 8
          %s247 = scalar_lea.hbm %s0, %s246
          %s248 = sshll.u32 %s247, 4
          %s249 = int_to_ptr.hbm [resolvable:$true] %s248
          %s250 = sshll.u32 %s241, 4
          %s251 = int_to_ptr.vmem [resolvable:$true] %s250
          %256 = dma.hbm_to_vmem [thread:$0]  %s249, 512, %s251, %s238, 128, 128, 8
        $region44: #{tpu_custom_call.1} parent=39 // pred_fallthru
          _
      $region40: #{tpu_custom_call.1} parent=5 // pred_fallthru
        _
      %p257 = scmp.le.s32.totalorder 1, %s19
      %p258 = scmp.lt.s32.totalorder %s19, 5
      %p259 = pnand %p257, %p258
      %p260 = pneg %p259
      // Predicated region
      $region45: #{tpu_custom_call.1} parent=5 // pred_check
        _
      $region46: #{tpu_custom_call.1} parent=5 // pred_check_branch
        %262 = sbr.rel (%p259) target = $region48
      $region47: #{tpu_custom_call.1} parent=5 // pred_region
        %s263 = ssub.s32 %s19, 1
        %s264 = sand.u32 %s32, 1
        %s265 = scalar_lea.sflag [#allocation3], %s264
        %s266 = sand.u32 %s32, 1
        %s267 = smul.addr %s266, 32
        %s268 = scalar_lea.vmem [#allocation2], %s267
        // Predicated region
        $region49: #{tpu_custom_call.1} parent=47 // pred_check
          %p269 = pneg %p45
        $region50: #{tpu_custom_call.1} parent=47 // pred_check_branch
          %271 = sbr.rel (%p269) target = $region52
        $region51: #{tpu_custom_call.1} parent=47 // pred_region
          %273 = dma.done %s265, 512
        $region52: #{tpu_custom_call.1} parent=47 // pred_fallthru
          _
        %s274 = sand.u32 %s32, 1
        %s275 = scalar_lea.sflag [#allocation3], %s274
        %s276 = sand.u32 %s32, 1
        %s277 = smul.addr %s276, 32
        %s278 = scalar_lea.vmem [#allocation2], %s277
        %p279 = pneg %p45
        %p280 = pneg %p42
        %p281 = pneg %p66
        %p282 = pneg %p63
        %p283 = pneg %p87
        %p284 = pneg %p84
        %p285 = pneg %p108
        %p286 = pneg %p105
        %p287 = pneg %p129
        %p288 = pneg %p126
        %p289 = pneg %p150
        %p290 = pneg %p147
        %p291 = pneg %p171
        %p292 = pneg %p168
        %p293 = pneg %p197
        %p294 = pneg %p194
        %s295 = sand.u32 %s184, 1
        %s296 = scalar_lea.sflag [#allocation4], %s295
        %s297 = sand.u32 %s184, 1
        %s298 = smul.addr %s297, 32
        %s299 = scalar_lea.vmem [#allocation5], %s298
        %s300 = smul.u32 2, %s24
        %s301 = smul.u32 2, %s24
        %v303 = vld [vmem:[%s268] sm:$0xff]
        %v304 = vld [vmem:[%s268 + $0x8] sm:$0xff]
        %v305 = vld [vmem:[%s268 + $0x10] sm:$0xff]
        %v306 = vld [vmem:[%s268 + $0x18] sm:$0xff]
        %v307 = vld [vmem:[%s1] sm:$0x1]
        %v308 = vld [vmem:[%s2] sm:$0x1]
        %309 = vadd.xlane.f32.xlu0 %v303
        %v310 = vpop.xlane.xlu0 %309
        %311 = vadd.xlane.f32.xlu0 %v304
        %v312 = vpop.xlane.xlu0 %311
        %313 = vadd.xlane.f32.xlu0 %v305
        %v314 = vpop.xlane.xlu0 %313
        %315 = vadd.xlane.f32.xlu0 %v306
        %v316 = vpop.xlane.xlu0 %315
        %v317 = vrcp.pop 128.0
        %v318 = vmul.f32 128.0, %v317
        %v319 = vsub.f32 1.0, %v318
        %v320 = vmul.f32 %v317, %v319
        %v321 = vadd.f32 %v317, %v320
        %vm322 = vweird.f32 %v317
        %v323 = vsel %vm322, %v317, %v321
        %v324 = vmul.f32 %v310, %v323
        %v325 = vmul.f32 %v312, %v323
        %v326 = vmul.f32 %v314, %v323
        %v327 = vmul.f32 %v316, %v323
        %v328 = vsub.f32 %v303, %v324
        %v329 = vsub.f32 %v304, %v325
        %v330 = vsub.f32 %v305, %v326
        %v331 = vsub.f32 %v306, %v327
        %v332 = vmul.f32 %v328, %v328
        %v333 = vmul.f32 %v329, %v329
        %v334 = vmul.f32 %v330, %v330
        %v335 = vmul.f32 %v331, %v331
        %336 = vadd.xlane.f32.xlu0 %v332
        %v337 = vpop.xlane.xlu0 %336
        %338 = vadd.xlane.f32.xlu0 %v333
        %v339 = vpop.xlane.xlu0 %338
        %340 = vadd.xlane.f32.xlu0 %v334
        %v341 = vpop.xlane.xlu0 %340
        %342 = vadd.xlane.f32.xlu0 %v335
        %v343 = vpop.xlane.xlu0 %342
        %v344 = vmul.f32 %v337, %v323
        %v345 = vmul.f32 %v339, %v323
        %v346 = vmul.f32 %v341, %v323
        %v347 = vmul.f32 %v343, %v323
        %v348 = vadd.f32 %v344, 1e-05
        %v349 = vadd.f32 %v345, 1e-05
        %v350 = vadd.f32 %v346, 1e-05
        %v351 = vadd.f32 %v347, 1e-05
        %v352 = vrsqrt.pop %v348
        %v353 = vmul.f32 %v352, %v348
        %v354 = vmul.f32 %v353, %v352
        %v355 = vmul.f32 0.5, %v354
        %v356 = vsub.f32 1.5, %v355
        %v357 = vmul.f32 %v352, %v356
        %vm358 = vweird.f32 %v348
        %vm359 = vweird.f32 %v352
        %vm360 = vmor %vm358, %vm359
        %v361 = vsel %vm360, %v352, %v357
        %v362 = vrsqrt.pop %v349
        %v363 = vmul.f32 %v362, %v349
        %v364 = vmul.f32 %v363, %v362
        %v365 = vmul.f32 0.5, %v364
        %v366 = vsub.f32 1.5, %v365
        %v367 = vmul.f32 %v362, %v366
        %vm368 = vweird.f32 %v349
        %vm369 = vweird.f32 %v362
        %vm370 = vmor %vm368, %vm369
        %v371 = vsel %vm370, %v362, %v367
        %v372 = vrsqrt.pop %v350
        %v373 = vmul.f32 %v372, %v350
        %v374 = vmul.f32 %v373, %v372
        %v375 = vmul.f32 0.5, %v374
        %v376 = vsub.f32 1.5, %v375
        %v377 = vmul.f32 %v372, %v376
        %vm378 = vweird.f32 %v350
        %vm379 = vweird.f32 %v372
        %vm380 = vmor %vm378, %vm379
        %v381 = vsel %vm380, %v372, %v377
        %v382 = vrsqrt.pop %v351
        %v383 = vmul.f32 %v382, %v351
        %v384 = vmul.f32 %v383, %v382
        %v385 = vmul.f32 0.5, %v384
        %v386 = vsub.f32 1.5, %v385
        %v387 = vmul.f32 %v382, %v386
        %vm388 = vweird.f32 %v351
        %vm389 = vweird.f32 %v382
        %vm390 = vmor %vm388, %vm389
        %v391 = vsel %vm390, %v382, %v387
        %v392 = vmul.f32 %v328, %v361
        %v393 = vmul.f32 %v329, %v371
        %v394 = vmul.f32 %v330, %v381
        %v395 = vmul.f32 %v331, %v391
        %v397 = vperm.slane %v307, 0
        %v399 = vmul.f32 %v392, %v397
        %v400 = vmul.f32 %v393, %v397
        %v401 = vmul.f32 %v394, %v397
        %v402 = vmul.f32 %v395, %v397
        %v404 = vperm.slane %v308, 0
        %v406 = vadd.f32 %v399, %v404
        %v407 = vadd.f32 %v400, %v404
        %v408 = vadd.f32 %v401, %v404
        %v409 = vadd.f32 %v402, %v404
        %v410 = vld [vmem:[%s3] sm:$0xf]
        %v411 = vld [vmem:[%s3 + $0x4] sm:$0xf]
        %v412 = vld [vmem:[%s3 + $0x8] sm:$0xf]
        %v413 = vld [vmem:[%s3 + $0xc] sm:$0xf]
        %v414 = vld [vmem:[%s3 + $0x10] sm:$0xf]
        %v415 = vld [vmem:[%s3 + $0x14] sm:$0xf]
        %v416 = vld [vmem:[%s3 + $0x18] sm:$0xf]
        %v417 = vld [vmem:[%s3 + $0x1c] sm:$0xf]
        %v418 = vld [vmem:[%s5] sm:$0xf]
        %v419 = vld [vmem:[%s5 + $0x4] sm:$0xf]
        %v420 = vld [vmem:[%s4] sm:$0xff]
        %v421 = vld [vmem:[%s4 + $0x8] sm:$0xff]
        %v422 = vld [vmem:[%s4 + $0x10] sm:$0xff]
        %v423 = vld [vmem:[%s4 + $0x18] sm:$0xff]
        %v424 = vld [vmem:[%s4 + $0x20] sm:$0xff]
        %v425 = vld [vmem:[%s4 + $0x28] sm:$0xff]
        %v426 = vld [vmem:[%s4 + $0x30] sm:$0xff]
        %v427 = vld [vmem:[%s4 + $0x38] sm:$0xff]
        %v428 = vld [vmem:[%s6] sm:$0xff]
        %v429 = vld [vmem:[%s6 + $0x8] sm:$0xff]
        %v430 = vpack.c.bf16 %v406, %v406
        %v431 = vpack.c.bf16 %v407, %v407
        %v432 = vpack.c.bf16 %v408, %v408
        %v433 = vpack.c.bf16 %v409, %v409
        %435 = vset.pattern.permute.xlu0 0
        %436 = vperm.xlu0 %435, %v420
        %v437 = vpop.permute.xlu0 %436
        %440 = vset.pattern.permute.xlu0 0
        %441 = vperm.xlu0 %440, %v421
        %v442 = vpop.permute.xlu0 %441
        %445 = vset.pattern.permute.xlu0 0
        %446 = vperm.xlu0 %445, %v422
        %v447 = vpop.permute.xlu0 %446
        %450 = vset.pattern.permute.xlu0 0
        %451 = vperm.xlu0 %450, %v423
        %v452 = vpop.permute.xlu0 %451
        %455 = vset.pattern.permute.xlu0 0
        %456 = vperm.xlu0 %455, %v424
        %v457 = vpop.permute.xlu0 %456
        %460 = vset.pattern.permute.xlu0 0
        %461 = vperm.xlu0 %460, %v425
        %v462 = vpop.permute.xlu0 %461
        %465 = vset.pattern.permute.xlu0 0
        %466 = vperm.xlu0 %465, %v426
        %v467 = vpop.permute.xlu0 %466
        %470 = vset.pattern.permute.xlu0 0
        %471 = vperm.xlu0 %470, %v427
        %v472 = vpop.permute.xlu0 %471
        %v482 = vunpack.c.l.b16 %v410
        %v483 = vunpack.c.l.b16 %v411
        %v484 = vunpack.c.l.b16 %v412
        %v485 = vunpack.c.l.b16 %v413
        %v486 = vunpack.c.l.b16 %v414
        %v487 = vunpack.c.l.b16 %v415
        %v488 = vunpack.c.l.b16 %v416
        %v489 = vunpack.c.l.b16 %v417
        %v490 = vpack.c.b16 %v483, %v482
        %v491 = vpack.c.b16 %v485, %v484
        %v492 = vpack.c.b16 %v487, %v486
        %v493 = vpack.c.b16 %v489, %v488
        %v496 = vunpack.c.l.b16 %v430
        %v497 = vunpack.c.l.b16 %v431
        %v498 = vpack.c.b16 %v497, %v496
        %vm500 = vcmask 130048
        %v502 = vsel %vm500, %v490, 0
        %v505 = vsel %vm500, %v491, 0
        %v508 = vsel %vm500, %v492, 0
        %v511 = vsel %vm500, %v493, 0
        %513 = vmatpush.bf16.msra.mxu0 0
        %514 = vmatpush.bf16.msra.mxu0 0
        %515 = vmatpush.bf16.msra.mxu0 0
        %516 = vmatpush.bf16.msra.mxu0 0
        %517 = vmatpush.bf16.msra.mxu0 0
        %518 = vmatpush.bf16.msra.mxu0 0
        %519 = vmatpush.bf16.msra.mxu0 0
        %520 = vmatpush.bf16.msra.mxu0 %v498
        %521 = vmatmul.bf16.gmra.mxu0 %v502
        %v522 = vpop.f32.mrf.mxu0
        %v523 = vadd.f32 %v437, %v522
        %v524 = vpop.f32.mrf.mxu0
        %v525 = vadd.f32 %v442, %v524
        %526 = vmatmul.bf16.gmra.mxu0 %v505
        %v527 = vpop.f32.mrf.mxu0
        %v528 = vadd.f32 %v447, %v527
        %v529 = vpop.f32.mrf.mxu0
        %v530 = vadd.f32 %v452, %v529
        %531 = vmatmul.bf16.gmra.mxu0 %v508
        %v532 = vpop.f32.mrf.mxu0
        %v533 = vadd.f32 %v457, %v532
        %v534 = vpop.f32.mrf.mxu0
        %v535 = vadd.f32 %v462, %v534
        %536 = vmatmul.bf16.gmra.mxu0 %v511
        %v537 = vpop.f32.mrf.mxu0
        %v538 = vadd.f32 %v467, %v537
        %v539 = vpop.f32.mrf.mxu0
        %v540 = vadd.f32 %v472, %v539
        %541 = vdwg.mxu0
        %v544 = vunpack.c.l.b16 %v432
        %v545 = vunpack.c.l.b16 %v433
        %v546 = vpack.c.b16 %v545, %v544
        %548 = vmatpush.bf16.msra.mxu0 0
        %549 = vmatpush.bf16.msra.mxu0 0
        %550 = vmatpush.bf16.msra.mxu0 0
        %551 = vmatpush.bf16.msra.mxu0 0
        %552 = vmatpush.bf16.msra.mxu0 0
        %553 = vmatpush.bf16.msra.mxu0 0
        %554 = vmatpush.bf16.msra.mxu0 0
        %555 = vmatpush.bf16.msra.mxu0 %v546
        %556 = vmatmul.bf16.gmra.mxu0 %v502
        %v557 = vpop.f32.mrf.mxu0
        %v558 = vadd.f32 %v437, %v557
        %v559 = vpop.f32.mrf.mxu0
        %v560 = vadd.f32 %v442, %v559
        %561 = vmatmul.bf16.gmra.mxu0 %v505
        %v562 = vpop.f32.mrf.mxu0
        %v563 = vadd.f32 %v447, %v562
        %v564 = vpop.f32.mrf.mxu0
        %v565 = vadd.f32 %v452, %v564
        %566 = vmatmul.bf16.gmra.mxu0 %v508
        %v567 = vpop.f32.mrf.mxu0
        %v568 = vadd.f32 %v457, %v567
        %v569 = vpop.f32.mrf.mxu0
        %v570 = vadd.f32 %v462, %v569
        %571 = vmatmul.bf16.gmra.mxu0 %v511
        %v572 = vpop.f32.mrf.mxu0
        %v573 = vadd.f32 %v467, %v572
        %v574 = vpop.f32.mrf.mxu0
        %v575 = vadd.f32 %v472, %v574
        %576 = vdwg.mxu0
        %v577 = vmul.f32 %v523, %v523
        %v578 = vmul.f32 %v525, %v525
        %v579 = vmul.f32 %v528, %v528
        %v580 = vmul.f32 %v530, %v530
        %v581 = vmul.f32 %v533, %v533
        %v582 = vmul.f32 %v535, %v535
        %v583 = vmul.f32 %v538, %v538
        %v584 = vmul.f32 %v540, %v540
        %v585 = vmul.f32 %v558, %v558
        %v586 = vmul.f32 %v560, %v560
        %v587 = vmul.f32 %v563, %v563
        %v588 = vmul.f32 %v565, %v565
        %v589 = vmul.f32 %v568, %v568
        %v590 = vmul.f32 %v570, %v570
        %v591 = vmul.f32 %v573, %v573
        %v592 = vmul.f32 %v575, %v575
        %v593 = vmul.f32 %v577, 0.035677407
        %v594 = vmul.f32 %v578, 0.035677407
        %v595 = vmul.f32 %v579, 0.035677407
        %v596 = vmul.f32 %v580, 0.035677407
        %v597 = vmul.f32 %v581, 0.035677407
        %v598 = vmul.f32 %v582, 0.035677407
        %v599 = vmul.f32 %v583, 0.035677407
        %v600 = vmul.f32 %v584, 0.035677407
        %v601 = vmul.f32 %v585, 0.035677407
        %v602 = vmul.f32 %v586, 0.035677407
        %v603 = vmul.f32 %v587, 0.035677407
        %v604 = vmul.f32 %v588, 0.035677407
        %v605 = vmul.f32 %v589, 0.035677407
        %v606 = vmul.f32 %v590, 0.035677407
        %v607 = vmul.f32 %v591, 0.035677407
        %v608 = vmul.f32 %v592, 0.035677407
        %v609 = vadd.f32 %v593, 0.7978846
        %v610 = vadd.f32 %v594, 0.7978846
        %v611 = vadd.f32 %v595, 0.7978846
        %v612 = vadd.f32 %v596, 0.7978846
        %v613 = vadd.f32 %v597, 0.7978846
        %v614 = vadd.f32 %v598, 0.7978846
        %v615 = vadd.f32 %v599, 0.7978846
        %v616 = vadd.f32 %v600, 0.7978846
        %v617 = vadd.f32 %v601, 0.7978846
        %v618 = vadd.f32 %v602, 0.7978846
        %v619 = vadd.f32 %v603, 0.7978846
        %v620 = vadd.f32 %v604, 0.7978846
        %v621 = vadd.f32 %v605, 0.7978846
        %v622 = vadd.f32 %v606, 0.7978846
        %v623 = vadd.f32 %v607, 0.7978846
        %v624 = vadd.f32 %v608, 0.7978846
        %v625 = vmul.f32 %v523, %v609
        %v626 = vmul.f32 %v525, %v610
        %v627 = vmul.f32 %v528, %v611
        %v628 = vmul.f32 %v530, %v612
        %v629 = vmul.f32 %v533, %v613
        %v630 = vmul.f32 %v535, %v614
        %v631 = vmul.f32 %v538, %v615
        %v632 = vmul.f32 %v540, %v616
        %v633 = vmul.f32 %v558, %v617
        %v634 = vmul.f32 %v560, %v618
        %v635 = vmul.f32 %v563, %v619
        %v636 = vmul.f32 %v565, %v620
        %v637 = vmul.f32 %v568, %v621
        %v638 = vmul.f32 %v570, %v622
        %v639 = vmul.f32 %v573, %v623
        %v640 = vmul.f32 %v575, %v624
        %v641 = vtanh.pop %v625
        %v642 = vtanh.pop %v626
        %v643 = vtanh.pop %v627
        %v644 = vtanh.pop %v628
        %v645 = vtanh.pop %v629
        %v646 = vtanh.pop %v630
        %v647 = vtanh.pop %v631
        %v648 = vtanh.pop %v632
        %v649 = vtanh.pop %v633
        %v650 = vtanh.pop %v634
        %v651 = vtanh.pop %v635
        %v652 = vtanh.pop %v636
        %v653 = vtanh.pop %v637
        %v654 = vtanh.pop %v638
        %v655 = vtanh.pop %v639
        %v656 = vtanh.pop %v640
        %v657 = vmul.f32 %v523, %v641
        %v658 = vmul.f32 %v525, %v642
        %v659 = vmul.f32 %v528, %v643
        %v660 = vmul.f32 %v530, %v644
        %v661 = vmul.f32 %v533, %v645
        %v662 = vmul.f32 %v535, %v646
        %v663 = vmul.f32 %v538, %v647
        %v664 = vmul.f32 %v540, %v648
        %v665 = vmul.f32 %v558, %v649
        %v666 = vmul.f32 %v560, %v650
        %v667 = vmul.f32 %v563, %v651
        %v668 = vmul.f32 %v565, %v652
        %v669 = vmul.f32 %v568, %v653
        %v670 = vmul.f32 %v570, %v654
        %v671 = vmul.f32 %v573, %v655
        %v672 = vmul.f32 %v575, %v656
        %v673 = vadd.f32 %v523, %v657
        %v674 = vadd.f32 %v525, %v658
        %v675 = vadd.f32 %v528, %v659
        %v676 = vadd.f32 %v530, %v660
        %v677 = vadd.f32 %v533, %v661
        %v678 = vadd.f32 %v535, %v662
        %v679 = vadd.f32 %v538, %v663
        %v680 = vadd.f32 %v540, %v664
        %v681 = vadd.f32 %v558, %v665
        %v682 = vadd.f32 %v560, %v666
        %v683 = vadd.f32 %v563, %v667
        %v684 = vadd.f32 %v565, %v668
        %v685 = vadd.f32 %v568, %v669
        %v686 = vadd.f32 %v570, %v670
        %v687 = vadd.f32 %v573, %v671
        %v688 = vadd.f32 %v575, %v672
        %v689 = vpack.c.bf16 %v673, %v673
        %v690 = vpack.c.bf16 %v674, %v674
        %v691 = vpack.c.bf16 %v675, %v675
        %v692 = vpack.c.bf16 %v676, %v676
        %v693 = vpack.c.bf16 %v677, %v677
        %v694 = vpack.c.bf16 %v678, %v678
        %v695 = vpack.c.bf16 %v679, %v679
        %v696 = vpack.c.bf16 %v680, %v680
        %v697 = vpack.c.bf16 %v681, %v681
        %v698 = vpack.c.bf16 %v682, %v682
        %v699 = vpack.c.bf16 %v683, %v683
        %v700 = vpack.c.bf16 %v684, %v684
        %v701 = vpack.c.bf16 %v685, %v685
        %v702 = vpack.c.bf16 %v686, %v686
        %v703 = vpack.c.bf16 %v687, %v687
        %v704 = vpack.c.bf16 %v688, %v688
        %v707 = vunpack.c.l.b16 %v418
        %v708 = vunpack.c.l.b16 %v419
        %v709 = vpack.c.b16 %v708, %v707
        %v718 = vunpack.c.l.b16 %v689
        %v719 = vunpack.c.l.b16 %v690
        %v720 = vunpack.c.l.b16 %v691
        %v721 = vunpack.c.l.b16 %v692
        %v722 = vunpack.c.l.b16 %v693
        %v723 = vunpack.c.l.b16 %v694
        %v724 = vunpack.c.l.b16 %v695
        %v725 = vunpack.c.l.b16 %v696
        %v726 = vpack.c.b16 %v719, %v718
        %v727 = vpack.c.b16 %v721, %v720
        %v728 = vpack.c.b16 %v723, %v722
        %v729 = vpack.c.b16 %v725, %v724
        %vm734 = vcmask 523264
        %v736 = vsel %vm734, %v709, 0
        %738 = vmatpush.bf16.msra.mxu0 0
        %739 = vmatpush.bf16.msra.mxu0 0
        %740 = vmatpush.bf16.msra.mxu0 0
        %741 = vmatpush.bf16.msra.mxu0 0
        %742 = vmatpush.bf16.msra.mxu0 %v729
        %743 = vmatpush.bf16.msra.mxu0 %v728
        %744 = vmatpush.bf16.msra.mxu0 %v727
        %745 = vmatpush.bf16.msra.mxu0 %v726
        %746 = vmatmul.bf16.gmra.mxu0 %v736
        %v747 = vpop.f32.mrf.mxu0
        %v748 = vadd.f32 0.0, %v747
        %v749 = vpop.f32.mrf.mxu0
        %v750 = vadd.f32 0.0, %v749
        %751 = vdwg.mxu0
        %v760 = vunpack.c.l.b16 %v697
        %v761 = vunpack.c.l.b16 %v698
        %v762 = vunpack.c.l.b16 %v699
        %v763 = vunpack.c.l.b16 %v700
        %v764 = vunpack.c.l.b16 %v701
        %v765 = vunpack.c.l.b16 %v702
        %v766 = vunpack.c.l.b16 %v703
        %v767 = vunpack.c.l.b16 %v704
        %v768 = vpack.c.b16 %v761, %v760
        %v769 = vpack.c.b16 %v763, %v762
        %v770 = vpack.c.b16 %v765, %v764
        %v771 = vpack.c.b16 %v767, %v766
        %776 = vmatpush.bf16.msra.mxu0 0
        %777 = vmatpush.bf16.msra.mxu0 0
        %778 = vmatpush.bf16.msra.mxu0 0
        %779 = vmatpush.bf16.msra.mxu0 0
        %780 = vmatpush.bf16.msra.mxu0 %v771
        %781 = vmatpush.bf16.msra.mxu0 %v770
        %782 = vmatpush.bf16.msra.mxu0 %v769
        %783 = vmatpush.bf16.msra.mxu0 %v768
        %784 = vmatmul.bf16.gmra.mxu0 %v736
        %v785 = vpop.f32.mrf.mxu0
        %v786 = vadd.f32 0.0, %v785
        %v787 = vpop.f32.mrf.mxu0
        %v788 = vadd.f32 0.0, %v787
        %789 = vdwg.mxu0
        %v790 = vadd.f32 %v303, %v748
        %v791 = vadd.f32 %v304, %v750
        %v792 = vadd.f32 %v305, %v786
        %v793 = vadd.f32 %v306, %v788
        %795 = vset.pattern.permute.xlu0 0
        %796 = vperm.xlu0 %795, %v428
        %v797 = vpop.permute.xlu0 %796
        %800 = vset.pattern.permute.xlu0 0
        %801 = vperm.xlu0 %800, %v429
        %v802 = vpop.permute.xlu0 %801
        %v804 = vadd.f32 %v790, %v797
        %v805 = vadd.f32 %v791, %v802
        %v806 = vadd.f32 %v792, %v797
        %v807 = vadd.f32 %v793, %v802
        %808 = vst [vmem:[%s299] sm:$0xff] %v804
        %809 = vst [vmem:[%s299 + $0x8] sm:$0xff] %v805
        %810 = vst [vmem:[%s299 + $0x10] sm:$0xff] %v806
        %811 = vst [vmem:[%s299 + $0x18] sm:$0xff] %v807
        %s812 = sand.u32 %s184, 1
        %s813 = scalar_lea.sflag [#allocation4], %s812
        %s814 = sand.u32 %s184, 1
        %s815 = smul.addr %s814, 32
        %s816 = scalar_lea.vmem [#allocation5], %s815
        // Predicated region
        $region53: #{tpu_custom_call.1} parent=47 // pred_check
          %p817 = pneg %p194
        $region54: #{tpu_custom_call.1} parent=47 // pred_check_branch
          %819 = sbr.rel (%p817) target = $region56
        $region55: #{tpu_custom_call.1} parent=47 // pred_region
          %s820 = smul.u32 2, %s24
          %822 = vsyncadd %s813, 0
          %s823 = smul.addr %s820, 2
          %s824 = smul.addr %s823, 8
          %s825 = scalar_lea.hbm %s7, %s824
          %s826 = sshll.u32 %s816, 4
          %s827 = int_to_ptr.vmem [resolvable:$true] %s826
          %s828 = sshll.u32 %s825, 4
          %s829 = int_to_ptr.hbm [resolvable:$true] %s828
          %834 = dma.vmem_to_hbm [thread:$0]  %s827, 512, %s829, %s813, 128, 128, 8
        $region56: #{tpu_custom_call.1} parent=47 // pred_fallthru
          _
      $region48: #{tpu_custom_call.1} parent=5 // pred_fallthru
        _
      %p835 = scmp.le.s32.totalorder 2, %s19
      // Predicated region
      $region57: #{tpu_custom_call.1} parent=5 // pred_check
        %p836 = pneg %p835
      $region58: #{tpu_custom_call.1} parent=5 // pred_check_branch
        %838 = sbr.rel (%p836) target = $region60
      $region59: #{tpu_custom_call.1} parent=5 // pred_region
        %s839 = ssub.s32 %s19, 2
        // Predicated region
        $region61: #{tpu_custom_call.1} parent=59 // pred_check
          %p840 = pneg %p200
        $region62: #{tpu_custom_call.1} parent=59 // pred_check_branch
          %842 = sbr.rel (%p840) target = $region64
        $region63: #{tpu_custom_call.1} parent=59 // pred_region
          %s843 = sand.u32 %s185, 1
          %s844 = scalar_lea.sflag [#allocation4], %s843
          %s845 = sand.u32 %s185, 1
          %s846 = smul.addr %s845, 32
          %s847 = scalar_lea.vmem [#allocation5], %s846
          %849 = dma.done %s844, 512
        $region64: #{tpu_custom_call.1} parent=59 // pred_fallthru
          _
      $region60: #{tpu_custom_call.1} parent=5 // pred_fallthru
        _
    $region6: #{tpu_custom_call.1} parent=1 // loop_footer
      %s23 = sadd.s32 1, %s19
    $region7: #{tpu_custom_call.1} parent=1 // loop_footer_branch
      %18 = sbr.rel target = $region3
    $region8: #{tpu_custom_call.1} parent=1 // loop_exit
      _
    %850 = vsyncpa [#allocation3], 1
    %s851 = scalar_lea.sflag [#allocation3], 1
    %852 = vsyncpa %s851, 1
    %853 = vsyncpa [#allocation4], 1
    %s854 = scalar_lea.sflag [#allocation4], 1
    %855 = vsyncpa %s854, 1

</llo_original>
